<compile_context>
chip_gen: v5e
topology: v5e:2x2
jax: 0.10.0
libtpu: 0.0.40
codegen_flags: <defaults>
</compile_context>

<pallas_src>
import jax
import jax.numpy as jnp
from jax.experimental import pallas as pl
from jax.experimental.pallas import tpu as pltpu


# ----------------------------------------------------------------------------
# Pallas kernel
# ----------------------------------------------------------------------------
def pmf_kernel(idx_ref, s_ref, out_ref):
    """One batch-tile of the PMF forward (batch on the lane axis).

    idx_ref: (2, TB)            int32   row 0 = climber idx, row 1 = problem idx
    s_ref  : (Vc_pad, Vp_pad)   float32 precomputed score matrix C @ P^T (padded)
    out_ref: (1, TB)            float32 sigmoid(S[ci, pi]) per example
    """
    vc_pad, vp_pad = s_ref.shape
    tb = idx_ref.shape[1]

    ci = idx_ref[0:1, :]                                          # (1, TB)
    pi = idx_ref[1:2, :]                                          # (1, TB)

    # One-hot over the problem vocab -> gather the needed columns of S on the
    # MXU: column j of `cols` is S[:, pi[j]].  0/1 values make this exact.
    iota_p = jax.lax.broadcasted_iota(jnp.int32, (vp_pad, tb), 0)  # (Vp_pad, TB)
    onehot_p = (iota_p == pi).astype(s_ref.dtype)                  # (Vp_pad, TB)
    cols = jnp.dot(s_ref[...], onehot_p,
                   preferred_element_type=jnp.float32)             # (Vc_pad, TB)

    # Select row ci[j] per lane and reduce over the (small) climber-vocab
    # sublane axis -> lane-dense (1, TB) result, stored directly.
    iota_c = jax.lax.broadcasted_iota(jnp.int32, (vc_pad, tb), 0)  # (Vc_pad, TB)
    sel = jnp.where(iota_c == ci, cols, 0.0)                       # (Vc_pad, TB)
    dot = jnp.sum(sel, axis=0, keepdims=True)                      # (1, TB)
    out_ref[...] = jax.nn.sigmoid(dot)


# ----------------------------------------------------------------------------
# Once-per-model table prep (hoisted out of the per-call path)
# ----------------------------------------------------------------------------
def _round_up(x, m):
    return ((x + m - 1) // m) * m


def precompute_scores(climber_emb, problem_emb):
    """S = climber_emb @ problem_emb.T, zero-padded to (8-mult, 128-mult)."""
    Vc, F = climber_emb.shape
    Vp, _ = problem_emb.shape
    s = jnp.dot(climber_emb.astype(jnp.float32),
                problem_emb.astype(jnp.float32).T)            # (Vc, Vp)
    vc_pad = _round_up(Vc, 8)
    vp_pad = _round_up(Vp, 128)
    s_pad = jnp.zeros((vc_pad, vp_pad), jnp.float32).at[:Vc, :Vp].set(s)
    return s_pad


# ----------------------------------------------------------------------------
# Forward wrapper
# ----------------------------------------------------------------------------
def _pick_batch_tile(batch, tb_max=512):
    """Lane-dense batch tile; keeps >=2 grid steps when batch allows (v7x)."""
    b128 = _round_up(max(batch, 1), 128)
    tb = min(tb_max, b128)
    if b128 // tb < 2 and b128 >= 256:
        tb = max(128, _round_up(b128 // 2, 128))
    return tb


def pmf_forward(climber_idx, problem_idx, s_pad, *, tb_max=512):
    """climber_idx/problem_idx: (B,) int; s_pad: padded C @ P^T -> (B,) f32."""
    B = climber_idx.shape[0]
    vc_pad, vp_pad = s_pad.shape

    tb = _pick_batch_tile(B, tb_max)
    num_tiles = pl.cdiv(B, tb)
    b_pad = num_tiles * tb

    # Pack both index vectors into one (num_tiles, 2, TB) slab.  Pad rows use
    # index 0 ('other' / 'Problem' specials -> valid rows), sliced off below.
    idx = jnp.stack([climber_idx.astype(jnp.int32),
                     problem_idx.astype(jnp.int32)], axis=0)        # (2, B)
    idx = jnp.pad(idx, ((0, 0), (0, b_pad - B)))                    # (2, b_pad)
    idx = idx.reshape(2, num_tiles, tb).transpose(1, 0, 2)          # (nt, 2, tb)

    out = pl.pallas_call(
        pmf_kernel,
        out_shape=jax.ShapeDtypeStruct((num_tiles, 1, tb), jnp.float32),
        grid_spec=pltpu.PrefetchScalarGridSpec(
            num_scalar_prefetch=0,
            grid=(num_tiles,),
            in_specs=[
                pl.BlockSpec((None, 2, tb), lambda i: (i, 0, 0)),     # packed idx tile
                pl.BlockSpec((vc_pad, vp_pad), lambda i: (0, 0)),     # resident S
            ],
            out_specs=pl.BlockSpec((None, 1, tb), lambda i: (i, 0, 0)),
        ),
        compiler_params=pltpu.CompilerParams(
            dimension_semantics=("parallel",)),
    )(idx, s_pad)
    return out.reshape(b_pad)[:B]


# ----------------------------------------------------------------------------
# Vocab glue (mirrors build_vocab_from_iterator + set_default_index)
# ----------------------------------------------------------------------------
def build_vocab(tokens, specials):
    vocab = {}
    for s in specials:
        vocab[s] = len(vocab)
    for t in tokens:
        if t not in vocab:
            vocab[t] = len(vocab)
    default_idx = vocab[specials[0]]
    return vocab, default_idx


def lookup(vocab, default_idx, tokens):
    return jnp.asarray([vocab.get(t, default_idx) for t in tokens],
                       dtype=jnp.int32)


# ----------------------------------------------------------------------------
# Main
# ----------------------------------------------------------------------------
if __name__ == "__main__":
    key = jax.random.PRNGKey(0)
    k_ce, k_pe, k_cn, k_pn = jax.random.split(key, 4)

    # Small synthetic "dataframe": climber names and problem ids.
    num_factors = 32            # F
    climber_names_all = [f"climber_{i}" for i in range(15)]
    problem_ids_all = [f"problem_{i}" for i in range(23)]

    climber_vocab, climber_default = build_vocab(climber_names_all, ["other"])
    problem_vocab, problem_default = build_vocab(problem_ids_all, ["Problem"])

    Vc = len(climber_vocab)     # 16
    Vp = len(problem_vocab)     # 24

    # nn.Embedding default init ~ N(0, 1), float32.
    climber_emb = jax.random.normal(k_ce, (Vc, num_factors), dtype=jnp.float32)
    problem_emb = jax.random.normal(k_pe, (Vp, num_factors), dtype=jnp.float32)

    # Batch of 200 (name, problem_id) string pairs; ids past the vocab range
    # are OOV and fall back to the default ('other' / 'Problem') index.
    B = 200
    cn_ids = jax.random.randint(k_cn, (B,), 0, 18).tolist()   # 15..17 -> OOV
    pn_ids = jax.random.randint(k_pn, (B,), 0, 25).tolist()   # 23..24 -> OOV
    batch_names = [f"climber_{i}" for i in cn_ids]
    batch_problems = [f"problem_{i}" for i in pn_ids]

    climber_idx = lookup(climber_vocab, climber_default, batch_names)
    problem_idx = lookup(problem_vocab, problem_default, batch_problems)

    # Once-per-model table prep (hoisted out of the forward call path).
    s_pad = jax.block_until_ready(precompute_scores(climber_emb, problem_emb))

    out = pmf_forward(climber_idx, problem_idx, s_pad)
    out = jax.block_until_ready(out)

    # Pure-JAX reference check (matches the PyTorch forward).
    cv = jnp.take(climber_emb, climber_idx, axis=0)
    pv = jnp.take(problem_emb, problem_idx, axis=0)
    ref = jax.nn.sigmoid(jnp.sum(cv * pv, axis=1))
    assert out.shape == (B,)
    assert jnp.allclose(out, ref, atol=1e-5, rtol=1e-5), \
        float(jnp.max(jnp.abs(out - ref)))

    print("KERNEL_OK")
</pallas_src>

<mosaic_0001>
module attributes {stable_mosaic.version = 11 : i64} {
  func.func @pmf_kernel(%arg0: i32, %arg1: memref<1x2x128xi32, #tpu.memory_space<vmem>>, %arg2: memref<16x128xf32, #tpu.memory_space<vmem>>, %arg3: memref<1x1x128xf32, #tpu.memory_space<vmem>>) attributes {dimension_semantics = [#tpu.dimension_semantics<parallel>], iteration_bounds = array<i64: 2>, scalar_prefetch = 0 : i64, scratch_operands = 0 : i64, tpu.core_type = #tpu.core_type<tc>, window_params = [{transform_indices = @transform_0, window_bounds = array<i64: 1, 2, 128>}, {pipeline_mode = #tpu.pipeline_mode<synchronous>, transform_indices = @transform_1, window_bounds = array<i64: 16, 128>}, {transform_indices = @transform_2, window_bounds = array<i64: 1, 1, 128>}]} {
    %c0 = arith.constant 0 : index
    %c0_0 = arith.constant 0 : index
    %c0_1 = arith.constant 0 : index
    %0 = vector.load %arg1[%c0, %c0_0, %c0_1] : memref<1x2x128xi32, #tpu.memory_space<vmem>>, vector<1x1x128xi32>
    %1 = vector.shape_cast %0 : vector<1x1x128xi32> to vector<1x128xi32>
    %c0_2 = arith.constant 0 : index
    %c1 = arith.constant 1 : index
    %c0_3 = arith.constant 0 : index
    %2 = vector.load %arg1[%c0_2, %c1, %c0_3] : memref<1x2x128xi32, #tpu.memory_space<vmem>>, vector<1x1x128xi32>
    %3 = vector.shape_cast %2 : vector<1x1x128xi32> to vector<1x128xi32>
    %4 = tpu.iota {dimensions = array<i32: 0>} : vector<128x128xi32>
    %5 = vector.broadcast %3 : vector<1x128xi32> to vector<128x128xi32>
    %6 = arith.cmpi eq, %4, %5 : vector<128x128xi32>
    %7 = arith.extui %6 : vector<128x128xi1> to vector<128x128xi32>
    %8 = arith.sitofp %7 : vector<128x128xi32> to vector<128x128xf32>
    %c0_4 = arith.constant 0 : index
    %c0_5 = arith.constant 0 : index
    %9 = vector.load %arg2[%c0_4, %c0_5] : memref<16x128xf32, #tpu.memory_space<vmem>>, vector<16x128xf32>
    %cst = arith.constant dense<0.000000e+00> : vector<16x128xf32>
    %10 = tpu.matmul %9, %8, %cst {dimension_numbers = #tpu.dot_dimension_numbers<[1], [0], [0], [1], [0, 0, 1, 1], [], []>} : vector<16x128xf32>, vector<128x128xf32>, vector<16x128xf32> -> vector<16x128xf32>
    %11 = tpu.iota {dimensions = array<i32: 0>} : vector<16x128xi32>
    %12 = vector.broadcast %1 : vector<1x128xi32> to vector<16x128xi32>
    %13 = arith.cmpi eq, %11, %12 : vector<16x128xi32>
    %cst_6 = arith.constant 0.000000e+00 : f32
    %14 = vector.broadcast %cst_6 : f32 to vector<16x128xf32>
    %15 = arith.select %13, %10, %14 : vector<16x128xi1>, vector<16x128xf32>
    %cst_7 = arith.constant dense<0.000000e+00> : vector<128xf32>
    %16 = vector.multi_reduction <add>, %15, %cst_7 [0] : vector<16x128xf32> to vector<128xf32>
    %17 = vector.shape_cast %16 : vector<128xf32> to vector<1x128xf32>
    %18 = arith.negf %17 : vector<1x128xf32>
    %19 = math.exp %18 : vector<1x128xf32>
    %cst_8 = arith.constant 1.000000e+00 : f32
    %20 = vector.broadcast %cst_8 : f32 to vector<1x128xf32>
    %21 = arith.addf %20, %19 : vector<1x128xf32>
    %22 = arith.divf %20, %21 : vector<1x128xf32>
    %c0_9 = arith.constant 0 : index
    %c0_10 = arith.constant 0 : index
    %c0_11 = arith.constant 0 : index
    %23 = vector.load %arg3[%c0_9, %c0_10, %c0_11] : memref<1x1x128xf32, #tpu.memory_space<vmem>>, vector<1x1x128xf32>
    %24 = vector.shape_cast %23 : vector<1x1x128xf32> to vector<1x128xf32>
    %25 = vector.shape_cast %22 : vector<1x128xf32> to vector<1x1x128xf32>
    tpu.vector_store %arg3[%c0_9, %c0_10, %c0_11], %25 {strides = array<i32>} : memref<1x1x128xf32, #tpu.memory_space<vmem>>, vector<1x1x128xf32>,
    return
  }
  func.func @transform_0(%arg0: i32) -> (i32, i32, i32) {
    %c0_i32 = arith.constant 0 : i32
    %c0_i32_0 = arith.constant 0 : i32
    %c0_i32_1 = arith.constant 0 : i32
    return %arg0, %c0_i32, %c0_i32_0 : i32, i32, i32
  }
  func.func @transform_1(%arg0: i32) -> (i32, i32) {
    %c0_i32 = arith.constant 0 : i32
    %c0_i32_0 = arith.constant 0 : i32
    %c0_i32_1 = arith.constant 0 : i32
    return %c0_i32, %c0_i32_0 : i32, i32
  }
  func.func @transform_2(%arg0: i32) -> (i32, i32, i32) {
    %c0_i32 = arith.constant 0 : i32
    %c0_i32_0 = arith.constant 0 : i32
    %c0_i32_1 = arith.constant 0 : i32
    return %arg0, %c0_i32, %c0_i32_0 : i32, i32, i32
  }
}

</mosaic_0001>

<llo_original>
// kernel: tpu_custom_call.1
$region0: #{tpu_custom_call.1}
  #allocation0 [shape = 'u32[]', space=smem, size = 0x4, offset = 0x4, fixed_abs, tag = 'smem constant byte address 0x4 - core index']
  #allocation1 [shape = 'u32[72,128]{1,0:T(1,128)}', space=vmem, size = 0x9000, scoped, tag = 'internal scratch']
  %s0 = inlined_call_operand.hbm [shape: s32[2,2,128], index: 0, kind: input, shape index: {}]
  %s1 = inlined_call_operand.hbm [shape: f32[16,128], index: 1, kind: input, shape index: {}]
  %s2 = inlined_call_operand.hbm [shape: f32[2,1,128], index: 2, kind: output, shape index: {}]
  %s3 = sld [smem:[#allocation0]]
  $region49: #{tpu_custom_call.1} parent=0
    _
  %s5 = ssub.s32 1, %s3
  %s6 = scalar_select 0, %s5, %s3
  $region1: #{tpu_custom_call.1} parent=0
    #allocation2 [shape = 'u8[2048]{0}', space=vmem, size = 0x800, scoped, tag = 'input window, operand 0']
    #allocation3 [shape = 's32[2]{0}', space=sflag, size = 0x8, scoped, tag = 'scoped memory for tpu_custom_call.1']
    #allocation4 [shape = 's32[2]{0}', space=sflag, size = 0x8, scoped, tag = 'scoped memory for tpu_custom_call.1']
    #allocation5 [shape = 'u8[8192]{0}', space=vmem, size = 0x2000, scoped, tag = 'input window, operand 1, single buffered']
    #allocation6 [shape = 's32[1]{0}', space=sflag, size = 0x4, scoped, tag = 'scoped memory for tpu_custom_call.1']
    #allocation7 [shape = 'u8[1024]{0}', space=vmem, size = 0x400, scoped, tag = 'output window, operand 0']
    %7 = vsyncpa [#allocation3], 0
    %s8 = scalar_lea.sflag [#allocation3], 1
    %9 = vsyncpa %s8, 0
    %10 = vsyncpa [#allocation6], 0
    %11 = vsyncpa [#allocation4], 0
    %s12 = scalar_lea.sflag [#allocation4], 1
    %13 = vsyncpa %s12, 0
    loop: start=0, step=1, limit=4
    $region2: #{tpu_custom_call.1} parent=1 // loop_pre_header
      _
    $region3: #{tpu_custom_call.1} parent=1 // loop_header
      %s15 = sphi 0, %s19
      %p16 = scmp.ge.s32.totalorder %s15, 4
      %s25 = sphi 0, %s27
      %s28 = sphi 0, %s25
      %s29 = sphi 0, %s28
      %s45 = sphi 0, %s29
      %s49 = sphi 0, %s49
      %s51 = sphi 0, %s49
      %s52 = sphi 0, %s51
      %s66 = sphi 0, %s52
      %s72 = sphi 0, %s74
      %s75 = sphi 0, %s72
      %s76 = sphi 0, %s75
      %s92 = sphi 0, %s76
    $region4: #{tpu_custom_call.1} parent=1 // loop_header_branch
      %18 = sbr.rel (%p16) target = $region8
    $region5: #{tpu_custom_call.1} parent=1 // loop_body
      %s20 = ssub.s32 %s15, 1
      %s21 = ssub.s32 %s15, 2
      %s22 = sadd.s32 %s15, 1
      %s23 = ssub.s32 %s15, %s22
      %p24 = scmp.eq.s32.totalorder %s23, 0
      %s26 = sadd.s32 %s25, 1
      %s27 = scalar_select %p24, %s25, %s26
      %p30 = pneg %p24
      %p31 = scmp.eq.s32.totalorder %s15, 1
      %p32 = por %p30, %p31
      %p33 = scmp.ne.s32.totalorder %s25, %s28
      %p34 = scmp.eq.s32.totalorder %s15, 0
      %p35 = por %p33, %p34
      %p36 = scmp.ne.s32.totalorder %s25, %s28
      %p37 = scmp.eq.s32.totalorder %s20, 1
      %p38 = por %p36, %p37
      %p39 = scmp.ne.s32.totalorder %s28, %s29
      %p40 = scmp.eq.s32.totalorder %s20, 0
      %p41 = por %p39, %p40
      %p42 = scmp.ne.s32.totalorder %s28, %s29
      %p43 = scmp.eq.s32.totalorder %s21, 1
      %p44 = por %p42, %p43
      %p46 = scmp.ne.s32.totalorder %s29, %s45
      %p47 = scmp.eq.s32.totalorder %s21, 0
      %p48 = por %p46, %p47
      %s50 = sadd.s32 %s49, 1
      %p53 = scmp.eq.s32.totalorder %s15, 1
      %p54 = scmp.ne.s32.totalorder %s49, %s51
      %p55 = scmp.eq.s32.totalorder %s15, 0
      %p56 = por %p54, %p55
      %p57 = scmp.ne.s32.totalorder %s49, %s51
      %p58 = scmp.eq.s32.totalorder %s20, 1
      %p59 = por %p57, %p58
      %p60 = scmp.ne.s32.totalorder %s51, %s52
      %p61 = scmp.eq.s32.totalorder %s20, 0
      %p62 = por %p60, %p61
      %p63 = scmp.ne.s32.totalorder %s51, %s52
      %p64 = scmp.eq.s32.totalorder %s21, 1
      %p65 = por %p63, %p64
      %p67 = scmp.ne.s32.totalorder %s52, %s66
      %p68 = scmp.eq.s32.totalorder %s21, 0
      %p69 = por %p67, %p68
      %s70 = ssub.s32 %s15, %s22
      %p71 = scmp.eq.s32.totalorder %s70, 0
      %s73 = sadd.s32 %s72, 1
      %s74 = scalar_select %p71, %s72, %s73
      %p77 = pneg %p71
      %p78 = scmp.eq.s32.totalorder %s15, 1
      %p79 = por %p77, %p78
      %p80 = scmp.ne.s32.totalorder %s72, %s75
      %p81 = scmp.eq.s32.totalorder %s15, 0
      %p82 = por %p80, %p81
      %p83 = scmp.ne.s32.totalorder %s72, %s75
      %p84 = scmp.eq.s32.totalorder %s20, 1
      %p85 = por %p83, %p84
      %p86 = scmp.ne.s32.totalorder %s75, %s76
      %p87 = scmp.eq.s32.totalorder %s20, 0
      %p88 = por %p86, %p87
      %p89 = scmp.ne.s32.totalorder %s75, %s76
      %p90 = scmp.eq.s32.totalorder %s21, 1
      %p91 = por %p89, %p90
      %p93 = scmp.ne.s32.totalorder %s76, %s92
      %p94 = scmp.eq.s32.totalorder %s21, 0
      %p95 = por %p93, %p94
      %p96 = scmp.le.s32.totalorder 1, %s15
      %p97 = scmp.lt.s32.totalorder %s15, 3
      %p98 = pnand %p96, %p97
      %p99 = pneg %p98
      // Predicated region
      $region9: #{tpu_custom_call.1} parent=5 // pred_check
        _
      $region10: #{tpu_custom_call.1} parent=5 // pred_check_branch
        %101 = sbr.rel (%p98) target = $region12
      $region11: #{tpu_custom_call.1} parent=5 // pred_region
        %s102 = ssub.s32 %s15, 1
        // Predicated region
        $region13: #{tpu_custom_call.1} parent=11 // pred_check
          %p103 = pneg %p62
        $region14: #{tpu_custom_call.1} parent=11 // pred_check_branch
          %105 = sbr.rel (%p103) target = $region16
        $region15: #{tpu_custom_call.1} parent=11 // pred_region
          %107 = vsyncadd [#allocation6], 0
          %s108 = sshll.u32 %s1, 4
          %s109 = int_to_ptr.hbm [resolvable:$true] %s108
          %s110 = sshll.u32 [#allocation5], 4
          %s111 = int_to_ptr.vmem [resolvable:$true] %s110
          %116 = dma.hbm_to_vmem [thread:$0]  %s109, 256, %s111, [#allocation6], 128, 128, 8
        $region16: #{tpu_custom_call.1} parent=11 // pred_fallthru
          _
      $region12: #{tpu_custom_call.1} parent=5 // pred_fallthru
        _
      %p117 = scmp.lt.s32.totalorder %s15, 2
      // Predicated region
      $region17: #{tpu_custom_call.1} parent=5 // pred_check
        %p118 = pneg %p117
      $region18: #{tpu_custom_call.1} parent=5 // pred_check_branch
        %120 = sbr.rel (%p118) target = $region20
      $region19: #{tpu_custom_call.1} parent=5 // pred_region
        // Predicated region
        $region21: #{tpu_custom_call.1} parent=19 // pred_check
          %p121 = pneg %p35
        $region22: #{tpu_custom_call.1} parent=19 // pred_check_branch
          %123 = sbr.rel (%p121) target = $region24
        $region23: #{tpu_custom_call.1} parent=19 // pred_region
          %s124 = sand.u32 %s25, 1
          %s125 = scalar_lea.sflag [#allocation3], %s124
          %s126 = sand.u32 %s25, 1
          %s127 = smul.addr %s126, 2
          %s128 = scalar_lea.vmem [#allocation2], %s127
          %130 = vsyncadd %s125, 0
          %s131 = smul.addr %s15, 2
          %s132 = scalar_lea.hbm %s0, %s131
          %s134 = sshll.u32 %s132, 4
          %s135 = int_to_ptr.hbm [resolvable:$true] %s134
          %s136 = sshll.u32 %s128, 4
          %s137 = int_to_ptr.vmem [resolvable:$true] %s136
          %139 = dma.hbm_to_vmem [thread:$0]  %s135, 32, %s137, %s125
        $region24: #{tpu_custom_call.1} parent=19 // pred_fallthru
          _
      $region20: #{tpu_custom_call.1} parent=5 // pred_fallthru
        _
      %p140 = scmp.le.s32.totalorder 1, %s15
      %p141 = scmp.lt.s32.totalorder %s15, 3
      %p142 = pnand %p140, %p141
      %p143 = pneg %p142
      // Predicated region
      $region25: #{tpu_custom_call.1} parent=5 // pred_check
        _
      $region26: #{tpu_custom_call.1} parent=5 // pred_check_branch
        %145 = sbr.rel (%p142) target = $region28
      $region27: #{tpu_custom_call.1} parent=5 // pred_region
        %s146 = ssub.s32 %s15, 1
        %s147 = sand.u32 %s28, 1
        %s148 = scalar_lea.sflag [#allocation3], %s147
        %s149 = sand.u32 %s28, 1
        %s150 = smul.addr %s149, 2
        %s151 = scalar_lea.vmem [#allocation2], %s150
        // Predicated region
        $region29: #{tpu_custom_call.1} parent=27 // pred_check
          %p152 = pneg %p41
        $region30: #{tpu_custom_call.1} parent=27 // pred_check_branch
          %154 = sbr.rel (%p152) target = $region32
        $region31: #{tpu_custom_call.1} parent=27 // pred_region
          %156 = dma.done %s148, 32
        $region32: #{tpu_custom_call.1} parent=27 // pred_fallthru
          _
        // Predicated region
        $region33: #{tpu_custom_call.1} parent=27 // pred_check
          %p157 = pneg %p62
        $region34: #{tpu_custom_call.1} parent=27 // pred_check_branch
          %159 = sbr.rel (%p157) target = $region36
        $region35: #{tpu_custom_call.1} parent=27 // pred_region
          %161 = dma.done [#allocation6], 256
        $region36: #{tpu_custom_call.1} parent=27 // pred_fallthru
          _
        %s162 = sand.u32 %s28, 1
        %s163 = scalar_lea.sflag [#allocation3], %s162
        %s164 = sand.u32 %s28, 1
        %s165 = smul.addr %s164, 2
        %s166 = scalar_lea.vmem [#allocation2], %s165
        %p167 = pneg %p41
        %p168 = pneg %p38
        %p169 = pneg %p62
        %p170 = pneg %p59
        %p171 = pneg %p88
        %p172 = pneg %p85
        %s173 = sand.u32 %s75, 1
        %s174 = scalar_lea.sflag [#allocation4], %s173
        %s175 = sand.u32 %s75, 1
        %s176 = scalar_lea.vmem [#allocation7], %s175
        %v177 = vld [vmem:[%s151] sm:$0x1]
        %v178 = vld [vmem:[%s151 + $0x1] sm:$0x1]
        %v179 = vlaneseq
        %v180 = vshrl.u32 %v179, 7
        %v181 = vadd.s32 %v180, 8
        %v182 = vadd.s32 %v180, 16
        %v183 = vadd.s32 %v180, 24
        %v184 = vadd.s32 %v180, 32
        %v185 = vadd.s32 %v180, 40
        %v186 = vadd.s32 %v180, 48
        %v187 = vadd.s32 %v180, 56
        %v188 = vadd.s32 %v180, 64
        %v189 = vadd.s32 %v180, 72
        %v190 = vadd.s32 %v180, 80
        %v191 = vadd.s32 %v180, 88
        %v192 = vadd.s32 %v180, 96
        %v193 = vadd.s32 %v180, 104
        %v194 = vadd.s32 %v180, 112
        %v195 = vadd.s32 %v180, 120
        %v196 = vperm.slane %v178, 0
        %vm197 = vcmp.eq.s32.totalorder %v180, %v196
        %vm198 = vcmp.eq.s32.totalorder %v181, %v196
        %vm199 = vcmp.eq.s32.totalorder %v182, %v196
        %vm200 = vcmp.eq.s32.totalorder %v183, %v196
        %vm201 = vcmp.eq.s32.totalorder %v184, %v196
        %vm202 = vcmp.eq.s32.totalorder %v185, %v196
        %vm203 = vcmp.eq.s32.totalorder %v186, %v196
        %vm204 = vcmp.eq.s32.totalorder %v187, %v196
        %vm205 = vcmp.eq.s32.totalorder %v188, %v196
        %vm206 = vcmp.eq.s32.totalorder %v189, %v196
        %vm207 = vcmp.eq.s32.totalorder %v190, %v196
        %vm208 = vcmp.eq.s32.totalorder %v191, %v196
        %vm209 = vcmp.eq.s32.totalorder %v192, %v196
        %vm210 = vcmp.eq.s32.totalorder %v193, %v196
        %vm211 = vcmp.eq.s32.totalorder %v194, %v196
        %vm212 = vcmp.eq.s32.totalorder %v195, %v196
        %v213 = vsel %vm197, 1, 0
        %v214 = vsel %vm198, 1, 0
        %v215 = vsel %vm199, 1, 0
        %v216 = vsel %vm200, 1, 0
        %v217 = vsel %vm201, 1, 0
        %v218 = vsel %vm202, 1, 0
        %v219 = vsel %vm203, 1, 0
        %v220 = vsel %vm204, 1, 0
        %v221 = vsel %vm205, 1, 0
        %v222 = vsel %vm206, 1, 0
        %v223 = vsel %vm207, 1, 0
        %v224 = vsel %vm208, 1, 0
        %v225 = vsel %vm209, 1, 0
        %v226 = vsel %vm210, 1, 0
        %v227 = vsel %vm211, 1, 0
        %v228 = vsel %vm212, 1, 0
        %v229 = vcvt.s32.f32 %v213
        %v230 = vcvt.s32.f32 %v214
        %v231 = vcvt.s32.f32 %v215
        %v232 = vcvt.s32.f32 %v216
        %v233 = vcvt.s32.f32 %v217
        %v234 = vcvt.s32.f32 %v218
        %v235 = vcvt.s32.f32 %v219
        %v236 = vcvt.s32.f32 %v220
        %v237 = vcvt.s32.f32 %v221
        %v238 = vcvt.s32.f32 %v222
        %v239 = vcvt.s32.f32 %v223
        %v240 = vcvt.s32.f32 %v224
        %v241 = vcvt.s32.f32 %v225
        %v242 = vcvt.s32.f32 %v226
        %v243 = vcvt.s32.f32 %v227
        %v244 = vcvt.s32.f32 %v228
        %v245 = vld [vmem:[#allocation5] sm:$0xff]
        %v246 = vld [vmem:[#allocation5 + $0x8] sm:$0xff]
        %247 = vmatpush.msra.mxu0 %v244
        %248 = vmatpush.msra.mxu0 %v243
        %249 = vmatpush.msra.mxu0 %v242
        %250 = vmatpush.msra.mxu0 %v241
        %251 = vmatpush.msra.mxu0 %v240
        %252 = vmatpush.msra.mxu0 %v239
        %253 = vmatpush.msra.mxu0 %v238
        %254 = vmatpush.msra.mxu0 %v237
        %255 = vmatpush.msra.mxu0 %v236
        %256 = vmatpush.msra.mxu0 %v235
        %257 = vmatpush.msra.mxu0 %v234
        %258 = vmatpush.msra.mxu0 %v233
        %259 = vmatpush.msra.mxu0 %v232
        %260 = vmatpush.msra.mxu0 %v231
        %261 = vmatpush.msra.mxu0 %v230
        %262 = vmatpush.msra.mxu0 %v229
        %263 = vmatmul.f32.gmra.mxu0 %v245
        %v264 = vpop.f32.mrf.mxu0
        %v265 = vadd.f32 0.0, %v264
        %266 = vmatmul.f32.gmra.mxu0 %v246
        %v267 = vpop.f32.mrf.mxu0
        %v268 = vadd.f32 0.0, %v267
        %269 = vdwg.mxu0
        %v270 = vperm.slane %v177, 0
        %vm271 = vcmp.eq.s32.totalorder %v180, %v270
        %vm272 = vcmp.eq.s32.totalorder %v181, %v270
        %v273 = vsel %vm271, %v265, 0.0
        %v274 = vsel %vm272, %v268, 0.0
        %v275 = vadd.f32 %v273, %v274
        %v276 = vrot.slane %v275, 4
        %v277 = vadd.f32 %v275, %v276
        %v278 = vrot.slane %v277, 2
        %v279 = vadd.f32 %v277, %v278
        %v280 = vrot.slane %v279, 1
        %v281 = vadd.f32 %v279, %v280
        %v282 = vxor.u32 %v281, 2147483648
        %v283 = vmul.f32 %v282, 1.442695
        %v284 = vpow.pop %v283
        %v285 = vadd.f32 %v284, 1.0
        %v286 = vrcp.pop %v285
        %v287 = vmul.f32 %v285, %v286
        %v288 = vsub.f32 1.0, %v287
        %v289 = vmul.f32 %v286, %v288
        %v290 = vadd.f32 %v286, %v289
        %vm291 = vweird.f32 %v285
        %vm292 = vweird.f32 %v286
        %vm293 = vmor %vm291, %vm292
        %v294 = vsel %vm293, %v286, %v290
        %v295 = vand.u32 2147483647, %v285
        %vm296 = vcmp.eq.f32.partialorder %v295, 8.507059e+37
        %v297 = vand.u32 %v285, 2147483648
        %v298 = vor.u32 1.1754944e-38, %v297
        %v299 = vsel %vm296, %v298, %v294
        %v300 = vmul.f32 1.0, %v299
        %301 = vst [vmem:[%s176] sm:$0x1] %v300
        %s302 = sand.u32 %s75, 1
        %s303 = scalar_lea.sflag [#allocation4], %s302
        %s304 = sand.u32 %s75, 1
        %s305 = scalar_lea.vmem [#allocation7], %s304
        // Predicated region
        $region37: #{tpu_custom_call.1} parent=27 // pred_check
          %p306 = pneg %p85
        $region38: #{tpu_custom_call.1} parent=27 // pred_check_branch
          %308 = sbr.rel (%p306) target = $region40
        $region39: #{tpu_custom_call.1} parent=27 // pred_region
          %310 = vsyncadd %s303, 0
          %s311 = scalar_lea.hbm %s2, %s20
          %s313 = sshll.u32 %s305, 4
          %s314 = int_to_ptr.vmem [resolvable:$true] %s313
          %s315 = sshll.u32 %s311, 4
          %s316 = int_to_ptr.hbm [resolvable:$true] %s315
          %318 = dma.vmem_to_hbm [thread:$0]  %s314, 16, %s316, %s303
        $region40: #{tpu_custom_call.1} parent=27 // pred_fallthru
          _
      $region28: #{tpu_custom_call.1} parent=5 // pred_fallthru
        _
      %p319 = scmp.le.s32.totalorder 2, %s15
      // Predicated region
      $region41: #{tpu_custom_call.1} parent=5 // pred_check
        %p320 = pneg %p319
      $region42: #{tpu_custom_call.1} parent=5 // pred_check_branch
        %322 = sbr.rel (%p320) target = $region44
      $region43: #{tpu_custom_call.1} parent=5 // pred_region
        %s323 = ssub.s32 %s15, 2
        // Predicated region
        $region45: #{tpu_custom_call.1} parent=43 // pred_check
          %p324 = pneg %p91
        $region46: #{tpu_custom_call.1} parent=43 // pred_check_branch
          %326 = sbr.rel (%p324) target = $region48
        $region47: #{tpu_custom_call.1} parent=43 // pred_region
          %s327 = sand.u32 %s76, 1
          %s328 = scalar_lea.sflag [#allocation4], %s327
          %s329 = sand.u32 %s76, 1
          %s330 = scalar_lea.vmem [#allocation7], %s329
          %332 = dma.done %s328, 16
        $region48: #{tpu_custom_call.1} parent=43 // pred_fallthru
          _
      $region44: #{tpu_custom_call.1} parent=5 // pred_fallthru
        _
    $region6: #{tpu_custom_call.1} parent=1 // loop_footer
      %s19 = sadd.s32 1, %s15
    $region7: #{tpu_custom_call.1} parent=1 // loop_footer_branch
      %14 = sbr.rel target = $region3
    $region8: #{tpu_custom_call.1} parent=1 // loop_exit
      _
    %333 = vsyncpa [#allocation3], 1
    %s334 = scalar_lea.sflag [#allocation3], 1
    %335 = vsyncpa %s334, 1
    %336 = vsyncpa [#allocation6], 1
    %337 = vsyncpa [#allocation4], 1
    %s338 = scalar_lea.sflag [#allocation4], 1
    %339 = vsyncpa %s338, 1

</llo_original>
